<compile_context>
chip_gen: v7x
topology: tpu7x:2x2x1
jax: 0.10.0
libtpu: 0.0.40
codegen_flags: <defaults>
</compile_context>

<pallas_src>
import jax
import jax.numpy as jnp
from jax.experimental import pallas as pl
from jax.experimental.pallas import tpu as pltpu


def _round_up(v, m):
    return ((v + m - 1) // m) * m


# --------------------------------------------------------------------------
# Kernel body: one node-tile of tanh(x @ W1 + b1) @ W2 + b2.
# x / W1 / W2 arrive in matmul_dtype (cast fused into the wrapper's pad copy);
# accumulation, bias add and tanh are f32.
# --------------------------------------------------------------------------
def _agg_tanh_kernel(x_ref, w1_ref, b1_ref, w2_ref, b2_ref, o_ref):
    p = jnp.dot(x_ref[...], w1_ref[...], preferred_element_type=jnp.float32)
    p = jnp.tanh(p + b1_ref[...])
    out = jnp.dot(p.astype(w2_ref.dtype), w2_ref[...],
                  preferred_element_type=jnp.float32) + b2_ref[...]
    o_ref[...] = out.astype(o_ref.dtype)


# --------------------------------------------------------------------------
# VMEM budget / tile sizing
# --------------------------------------------------------------------------
def _vmem_budget_bytes():
    """Generation-aware scoped-VMEM budget (leaves compiler headroom)."""
    try:
        cap = int(pltpu.get_tpu_info().vmem_capacity_bytes)
    except Exception:  # info query unavailable -> assume the smallest (v7x-like)
        cap = 64 * 1024 * 1024
    if cap <= 64 * 1024 * 1024:
        # v7x-class: 64 MiB physical per TC -> never request it all.
        return int(cap * 0.75)
    # v5e/v6e-class: 128 MiB physical -> allow up to ~110 MiB.
    return min(int(cap * 0.85), 110 * 1024 * 1024)


def _pick_node_tile(n, hp, xin_bytes, out_bytes, w_bytes, vmem_budget):
    """Largest sublane-aligned row tile that fits the VMEM budget, capped so
    the parallel grid has >= 2 balanced steps (v7x megacore)."""
    # Resident constants (worst case: double-buffered weights + biases).
    const_bytes = 2 * hp * hp * w_bytes * 2 + 2 * hp * 4 * 2
    avail = vmem_budget - const_bytes
    # Per-row bytes: x tile (2 bufs) + out tile (2 bufs) + f32 intermediates.
    per_row = hp * (2 * xin_bytes + 2 * out_bytes + 4 * 4)
    tile = avail // per_row if avail > 0 else 8
    tile = int(max(8, min(tile, 4096)))
    # Keep at least two (balanced) grid steps so both v7x TCs get work.
    half = _round_up(max(-(-n // 2), 8), 8)
    tile = min(tile, half)
    return max(8, (tile // 8) * 8)


# --------------------------------------------------------------------------
# Wrapper
# --------------------------------------------------------------------------
def aggregation_module_tanh(x, w1, b1, w2, b2, *, node_tile=None,
                            matmul_dtype=jnp.bfloat16, out_dtype=None):
    """x: [N, H]; w1/w2: [H, H] stored as [in, out] (transposed vs torch's
    [out, in]); b1/b2: [H].  Returns [N, H] in out_dtype (default x.dtype)."""
    n, h = x.shape
    assert w1.shape == (h, h) and w2.shape == (h, h)
    assert b1.shape == (h,) and b2.shape == (h,)
    if out_dtype is None:
        out_dtype = x.dtype

    f32 = jnp.float32
    hp = _round_up(h, 128)
    xin_bytes = jnp.dtype(matmul_dtype).itemsize
    out_bytes = jnp.dtype(out_dtype).itemsize
    w_bytes = jnp.dtype(matmul_dtype).itemsize

    vmem_budget = _vmem_budget_bytes()
    if node_tile is None:
        tile = _pick_node_tile(n, hp, xin_bytes, out_bytes, w_bytes,
                               vmem_budget)
    else:
        tile = max(8, _round_up(int(node_tile), 8))
    n_pad = _round_up(n, tile)
    grid = (n_pad // tile,)

    # ---- operand prep: skip pad copies when already aligned ---------------
    if h == hp and n == n_pad and x.dtype == matmul_dtype:
        x_p = x
    else:
        x_p = jnp.zeros((n_pad, hp), matmul_dtype).at[:n, :h].set(
            x.astype(matmul_dtype))

    def _prep_w(w):
        if h == hp and w.dtype == matmul_dtype:
            return w
        return jnp.zeros((hp, hp), matmul_dtype).at[:h, :h].set(
            w.astype(matmul_dtype))

    def _prep_b(b):
        if h == hp and b.dtype == f32:
            return b.reshape(1, hp)
        return jnp.zeros((1, hp), f32).at[0, :h].set(b.astype(f32))

    w1_p, w2_p = _prep_w(w1), _prep_w(w2)
    b1_p, b2_p = _prep_b(b1), _prep_b(b2)

    # ---- advisory cost + scoped VMEM request -------------------------------
    cost = pl.CostEstimate(
        flops=4 * n_pad * hp * hp,                     # two [tile,H]x[H,H] matmuls
        transcendentals=n_pad * hp,                    # tanh
        bytes_accessed=(n_pad * hp * (xin_bytes + out_bytes)   # x in + out
                        + 2 * hp * hp * w_bytes                # W1, W2
                        + 2 * hp * 4))                         # b1, b2

    need = (2 * hp * hp * w_bytes * 2 + 2 * hp * 4 * 2
            + tile * hp * (2 * xin_bytes + 2 * out_bytes + 4 * 4))
    vmem_limit = int(min(vmem_budget, max(2 * need, 32 * 1024 * 1024)))
    vmem_limit = int(min(vmem_budget, max(vmem_limit, need + (4 << 20))))

    # ---- pallas_call --------------------------------------------------------
    def _build(single_buffer_consts):
        if single_buffer_consts:
            def const_spec(shape):
                return pl.BlockSpec(shape, lambda i: (0, 0),
                                    pipeline_mode=pl.Buffered(1))
        else:
            def const_spec(shape):
                return pl.BlockSpec(shape, lambda i: (0, 0))
        return pl.pallas_call(
            _agg_tanh_kernel,
            out_shape=jax.ShapeDtypeStruct((n_pad, hp), out_dtype),
            grid_spec=pltpu.PrefetchScalarGridSpec(
                num_scalar_prefetch=0,
                grid=grid,
                in_specs=[
                    pl.BlockSpec((tile, hp), lambda i: (i, 0)),  # x tile
                    const_spec((hp, hp)),                        # W1
                    const_spec((1, hp)),                         # b1
                    const_spec((hp, hp)),                        # W2
                    const_spec((1, hp)),                         # b2
                ],
                out_specs=pl.BlockSpec((tile, hp), lambda i: (i, 0)),
            ),
            compiler_params=pltpu.CompilerParams(
                dimension_semantics=("parallel",),
                vmem_limit_bytes=vmem_limit),
            cost_estimate=cost,
        )

    # Single-buffering the constants only matters (VMEM-wise) when the weight
    # footprint is large; for small H the default path avoids any risk.
    if 2 * hp * hp * w_bytes >= (4 << 20):
        try:
            out_p = _build(True)(x_p, w1_p, b1_p, w2_p, b2_p)
        except (TypeError, NotImplementedError, pltpu.LoweringException):
            # Only pipeline_mode / Buffered(1) rejection is retried; genuine
            # compile / VMEM errors from the default path still surface.
            out_p = _build(False)(x_p, w1_p, b1_p, w2_p, b2_p)
    else:
        out_p = _build(False)(x_p, w1_p, b1_p, w2_p, b2_p)

    return out_p[:n, :h]


def _reference(x, w1, b1, w2, b2):
    p = jnp.tanh(x @ w1 + b1)
    return p @ w2 + b2


if __name__ == "__main__":
    key = jax.random.PRNGKey(0)
    kx, kw1, kb1, kw2, kb2, krest = jax.random.split(key, 6)

    # Small shapes consistent with the module: nodes x hidden_channels.
    nodes, hidden = 8, 32
    bound = 1.0 / (hidden ** 0.5)
    x = jax.random.normal(kx, (nodes, hidden), dtype=jnp.float32)
    w1 = jax.random.uniform(kw1, (hidden, hidden), jnp.float32, -bound, bound)
    b1 = jax.random.uniform(kb1, (hidden,), jnp.float32, -bound, bound)
    w2 = jax.random.uniform(kw2, (hidden, hidden), jnp.float32, -bound, bound)
    b2 = jax.random.uniform(kb2, (hidden,), jnp.float32, -bound, bound)

    ref = _reference(x, w1, b1, w2, b2)

    # f32 MXU path: tight check against the reference.
    out_f32 = jax.block_until_ready(
        aggregation_module_tanh(x, w1, b1, w2, b2, matmul_dtype=jnp.float32))
    assert out_f32.shape == (nodes, hidden)
    assert jnp.allclose(out_f32, ref, atol=1e-4, rtol=1e-4), "f32 mismatch"

    # Default bf16 MXU path (fast path on v6e/v7x): looser tolerance.
    out_bf16 = jax.block_until_ready(
        aggregation_module_tanh(x, w1, b1, w2, b2))
    assert out_bf16.shape == (nodes, hidden)
    assert jnp.allclose(out_bf16, ref, atol=3e-2, rtol=3e-2), "bf16 mismatch"

    # Ragged / multi-tile case: exercises H->128 padding, node padding and the
    # auto-derived node tile (capped at ceil(n/2) -> a 2-step parallel grid).
    n2, h2 = 300, 96
    bound2 = 1.0 / (h2 ** 0.5)
    k = jax.random.split(krest, 5)
    x2 = jax.random.normal(k[0], (n2, h2), dtype=jnp.float32)
    w1b = jax.random.uniform(k[1], (h2, h2), jnp.float32, -bound2, bound2)
    b1b = jax.random.uniform(k[2], (h2,), jnp.float32, -bound2, bound2)
    w2b = jax.random.uniform(k[3], (h2, h2), jnp.float32, -bound2, bound2)
    b2b = jax.random.uniform(k[4], (h2,), jnp.float32, -bound2, bound2)
    out2 = jax.block_until_ready(
        aggregation_module_tanh(x2, w1b, b1b, w2b, b2b))
    ref2 = _reference(x2, w1b, b1b, w2b, b2b)
    assert out2.shape == (n2, h2)
    assert jnp.allclose(out2, ref2, atol=3e-2, rtol=3e-2), "tiled mismatch"

    # Fully aligned case (H multiple of 128, N multiple of the tile, dtype
    # matches matmul_dtype): exercises the zero-copy fast path in the wrapper.
    n3, h3 = 256, 128
    bound3 = 1.0 / (h3 ** 0.5)
    k3 = jax.random.split(k[4], 5)
    x3 = jax.random.normal(k3[0], (n3, h3), dtype=jnp.float32)
    w1c = jax.random.uniform(k3[1], (h3, h3), jnp.float32, -bound3, bound3)
    b1c = jax.random.uniform(k3[2], (h3,), jnp.float32, -bound3, bound3)
    w2c = jax.random.uniform(k3[3], (h3, h3), jnp.float32, -bound3, bound3)
    b2c = jax.random.uniform(k3[4], (h3,), jnp.float32, -bound3, bound3)
    out3 = jax.block_until_ready(
        aggregation_module_tanh(x3, w1c, b1c, w2c, b2c,
                                matmul_dtype=jnp.float32))
    ref3 = _reference(x3, w1c, b1c, w2c, b2c)
    assert out3.shape == (n3, h3)
    assert jnp.allclose(out3, ref3, atol=2e-3, rtol=2e-3), "aligned mismatch"

    print("KERNEL_OK")
</pallas_src>

<mosaic_0001>
module attributes {stable_mosaic.version = 11 : i64} {
  func.func @_agg_tanh_kernel(%arg0: i32, %arg1: memref<8x128xf32, #tpu.memory_space<vmem>>, %arg2: memref<128x128xf32, #tpu.memory_space<vmem>>, %arg3: memref<1x128xf32, #tpu.memory_space<vmem>>, %arg4: memref<128x128xf32, #tpu.memory_space<vmem>>, %arg5: memref<1x128xf32, #tpu.memory_space<vmem>>, %arg6: memref<8x128xf32, #tpu.memory_space<vmem>>) attributes {dimension_semantics = [#tpu.dimension_semantics<parallel>], iteration_bounds = array<i64: 1>, scalar_prefetch = 0 : i64, scratch_operands = 0 : i64, tpu.core_type = #tpu.core_type<tc>, window_params = [{transform_indices = @transform_0, window_bounds = array<i64: 8, 128>}, {pipeline_mode = #tpu.pipeline_mode<synchronous>, transform_indices = @transform_1, window_bounds = array<i64: 128, 128>}, {pipeline_mode = #tpu.pipeline_mode<synchronous>, transform_indices = @transform_2, window_bounds = array<i64: 1, 128>}, {pipeline_mode = #tpu.pipeline_mode<synchronous>, transform_indices = @transform_3, window_bounds = array<i64: 128, 128>}, {pipeline_mode = #tpu.pipeline_mode<synchronous>, transform_indices = @transform_4, window_bounds = array<i64: 1, 128>}, {transform_indices = @transform_5, window_bounds = array<i64: 8, 128>}]} {
    %c0 = arith.constant 0 : index
    %c0_0 = arith.constant 0 : index
    %0 = vector.load %arg1[%c0, %c0_0] : memref<8x128xf32, #tpu.memory_space<vmem>>, vector<8x128xf32>
    %c0_1 = arith.constant 0 : index
    %c0_2 = arith.constant 0 : index
    %1 = vector.load %arg2[%c0_1, %c0_2] : memref<128x128xf32, #tpu.memory_space<vmem>>, vector<128x128xf32>
    %cst = arith.constant dense<0.000000e+00> : vector<8x128xf32>
    %2 = tpu.matmul %0, %1, %cst {dimension_numbers = #tpu.dot_dimension_numbers<[1], [0], [0], [1], [0, 0, 1, 1], [], []>} : vector<8x128xf32>, vector<128x128xf32>, vector<8x128xf32> -> vector<8x128xf32>
    %c0_3 = arith.constant 0 : index
    %c0_4 = arith.constant 0 : index
    %3 = vector.load %arg3[%c0_3, %c0_4] : memref<1x128xf32, #tpu.memory_space<vmem>>, vector<1x128xf32>
    %4 = vector.broadcast %3 : vector<1x128xf32> to vector<8x128xf32>
    %5 = arith.addf %2, %4 : vector<8x128xf32>
    %6 = math.tanh %5 : vector<8x128xf32>
    %c0_5 = arith.constant 0 : index
    %c0_6 = arith.constant 0 : index
    %7 = vector.load %arg4[%c0_5, %c0_6] : memref<128x128xf32, #tpu.memory_space<vmem>>, vector<128x128xf32>
    %cst_7 = arith.constant dense<0.000000e+00> : vector<8x128xf32>
    %8 = tpu.matmul %6, %7, %cst_7 {dimension_numbers = #tpu.dot_dimension_numbers<[1], [0], [0], [1], [0, 0, 1, 1], [], []>} : vector<8x128xf32>, vector<128x128xf32>, vector<8x128xf32> -> vector<8x128xf32>
    %c0_8 = arith.constant 0 : index
    %c0_9 = arith.constant 0 : index
    %9 = vector.load %arg5[%c0_8, %c0_9] : memref<1x128xf32, #tpu.memory_space<vmem>>, vector<1x128xf32>
    %10 = vector.broadcast %9 : vector<1x128xf32> to vector<8x128xf32>
    %11 = arith.addf %8, %10 : vector<8x128xf32>
    %c0_10 = arith.constant 0 : index
    %c0_11 = arith.constant 0 : index
    %12 = vector.load %arg6[%c0_10, %c0_11] : memref<8x128xf32, #tpu.memory_space<vmem>>, vector<8x128xf32>
    tpu.vector_store %arg6[%c0_10, %c0_11], %11 {strides = array<i32>} : memref<8x128xf32, #tpu.memory_space<vmem>>, vector<8x128xf32>,
    return
  }
  func.func @transform_0(%arg0: i32) -> (i32, i32) {
    %c0_i32 = arith.constant 0 : i32
    %c0_i32_0 = arith.constant 0 : i32
    return %arg0, %c0_i32 : i32, i32
  }
  func.func @transform_1(%arg0: i32) -> (i32, i32) {
    %c0_i32 = arith.constant 0 : i32
    %c0_i32_0 = arith.constant 0 : i32
    %c0_i32_1 = arith.constant 0 : i32
    return %c0_i32, %c0_i32_0 : i32, i32
  }
  func.func @transform_2(%arg0: i32) -> (i32, i32) {
    %c0_i32 = arith.constant 0 : i32
    %c0_i32_0 = arith.constant 0 : i32
    %c0_i32_1 = arith.constant 0 : i32
    return %c0_i32, %c0_i32_0 : i32, i32
  }
  func.func @transform_3(%arg0: i32) -> (i32, i32) {
    %c0_i32 = arith.constant 0 : i32
    %c0_i32_0 = arith.constant 0 : i32
    %c0_i32_1 = arith.constant 0 : i32
    return %c0_i32, %c0_i32_0 : i32, i32
  }
  func.func @transform_4(%arg0: i32) -> (i32, i32) {
    %c0_i32 = arith.constant 0 : i32
    %c0_i32_0 = arith.constant 0 : i32
    %c0_i32_1 = arith.constant 0 : i32
    return %c0_i32, %c0_i32_0 : i32, i32
  }
  func.func @transform_5(%arg0: i32) -> (i32, i32) {
    %c0_i32 = arith.constant 0 : i32
    %c0_i32_0 = arith.constant 0 : i32
    return %arg0, %c0_i32 : i32, i32
  }
}

</mosaic_0001>

<llo_original>
// kernel: tpu_custom_call.1
$region0: #{tpu_custom_call.1}
  #allocation0 [shape = 'u32[]', space=smem, size = 0x4, offset = 0x4, fixed_abs, tag = 'smem constant byte address 0x4 - core index']
  #allocation1 [shape = 'u32[144,128]{1,0:T(1,128)}', space=vmem, size = 0x12000, scoped, tag = 'internal scratch']
  %s0 = inlined_call_operand.hbm [shape: f32[8,128], index: 0, kind: input, shape index: {}]
  %s1 = inlined_call_operand.hbm [shape: f32[128,128], index: 1, kind: input, shape index: {}]
  %s2 = inlined_call_operand.vmem [shape: f32[1,128], index: 2, kind: input, shape index: {}]
  %s3 = inlined_call_operand.hbm [shape: f32[128,128], index: 3, kind: input, shape index: {}]
  %s4 = inlined_call_operand.vmem [shape: f32[1,128], index: 4, kind: input, shape index: {}]
  %s5 = inlined_call_operand.hbm [shape: f32[8,128], index: 5, kind: output, shape index: {}]
  %s6 = sld [smem:[#allocation0]]
  $region42: #{tpu_custom_call.1} parent=0
    _
  %s8 = ssub.s32 1, %s6
  %s9 = scalar_select 0, %s8, %s6
  $region1: #{tpu_custom_call.1} parent=0
    #allocation2 [shape = 'u8[4096]{0}', space=vmem, size = 0x1000, scoped, tag = 'input window, operand 0, single buffered']
    #allocation3 [shape = 's32[1]{0}', space=sflag, size = 0x4, scoped, tag = 'scoped memory for tpu_custom_call.1']
    #allocation4 [shape = 's32[1]{0}', space=sflag, size = 0x4, scoped, tag = 'scoped memory for tpu_custom_call.1']
    #allocation5 [shape = 'u8[65536]{0}', space=vmem, size = 0x10000, scoped, tag = 'input window, operand 1, single buffered']
    #allocation6 [shape = 's32[1]{0}', space=sflag, size = 0x4, scoped, tag = 'scoped memory for tpu_custom_call.1']
    #allocation7 [shape = 'u8[65536]{0}', space=vmem, size = 0x10000, scoped, tag = 'input window, operand 3, single buffered']
    #allocation8 [shape = 'u8[4096]{0}', space=vmem, size = 0x1000, scoped, tag = 'output window, operand 0, single buffered']
    %10 = vsyncpa [#allocation3], 0
    %11 = vsyncpa [#allocation6], 0
    %12 = vsyncpa [#allocation4], 0
    // Predicated region
    $region2: #{tpu_custom_call.1} parent=1 // pred_check
      _
    $region3: #{tpu_custom_call.1} parent=1 // pred_check_branch
      %14 = sbr.rel (0) target = $region5
    $region4: #{tpu_custom_call.1} parent=1 // pred_region
      %s16 = ssub.s32 128, 128
      %17 = vsyncadd [#allocation3], %s16
      %s19 = sshll.u32 [#allocation2], 4
      %s20 = int_to_ptr.vmem [resolvable:$true] %s19
      %22 = dma.hbm_to_vmem [thread:$0]  %s0, 128, %s20, [#allocation3]
    $region5: #{tpu_custom_call.1} parent=1 // pred_fallthru
      _
    // Predicated region
    $region6: #{tpu_custom_call.1} parent=1 // pred_check
      _
    $region7: #{tpu_custom_call.1} parent=1 // pred_check_branch
      %24 = sbr.rel (0) target = $region9
    $region8: #{tpu_custom_call.1} parent=1 // pred_region
      %s26 = ssub.s32 2048, 2048
      %27 = vsyncadd [#allocation6], %s26
      %s28 = sshll.u32 [#allocation5], 4
      %s29 = int_to_ptr.vmem [resolvable:$true] %s28
      %34 = dma.hbm_to_vmem [thread:$0]  %s1, 2048, %s29, [#allocation6], 128, 128, 8
    $region9: #{tpu_custom_call.1} parent=1 // pred_fallthru
      _
    // Predicated region
    $region10: #{tpu_custom_call.1} parent=1 // pred_check
      _
    $region11: #{tpu_custom_call.1} parent=1 // pred_check_branch
      %36 = sbr.rel (0) target = $region13
    $region12: #{tpu_custom_call.1} parent=1 // pred_region
      _
    $region13: #{tpu_custom_call.1} parent=1 // pred_fallthru
      _
    // Predicated region
    $region14: #{tpu_custom_call.1} parent=1 // pred_check
      _
    $region15: #{tpu_custom_call.1} parent=1 // pred_check_branch
      %38 = sbr.rel (0) target = $region17
    $region16: #{tpu_custom_call.1} parent=1 // pred_region
      %s40 = ssub.s32 2048, 2048
      %41 = vsyncadd [#allocation6], %s40
      %s42 = sshll.u32 [#allocation7], 4
      %s43 = int_to_ptr.vmem [resolvable:$true] %s42
      %48 = dma.hbm_to_vmem [thread:$0]  %s3, 2048, %s43, [#allocation6], 128, 128, 8
    $region17: #{tpu_custom_call.1} parent=1 // pred_fallthru
      _
    // Predicated region
    $region18: #{tpu_custom_call.1} parent=1 // pred_check
      _
    $region19: #{tpu_custom_call.1} parent=1 // pred_check_branch
      %50 = sbr.rel (0) target = $region21
    $region20: #{tpu_custom_call.1} parent=1 // pred_region
      _
    $region21: #{tpu_custom_call.1} parent=1 // pred_fallthru
      _
    // Predicated region
    $region22: #{tpu_custom_call.1} parent=1 // pred_check
      _
    $region23: #{tpu_custom_call.1} parent=1 // pred_check_branch
      %52 = sbr.rel (0) target = $region25
    $region24: #{tpu_custom_call.1} parent=1 // pred_region
      %53 = dma.done [#allocation3], 128
    $region25: #{tpu_custom_call.1} parent=1 // pred_fallthru
      _
    // Predicated region
    $region26: #{tpu_custom_call.1} parent=1 // pred_check
      _
    $region27: #{tpu_custom_call.1} parent=1 // pred_check_branch
      %55 = sbr.rel (0) target = $region29
    $region28: #{tpu_custom_call.1} parent=1 // pred_region
      %56 = dma.done [#allocation6], 2048
    $region29: #{tpu_custom_call.1} parent=1 // pred_fallthru
      _
    // Predicated region
    $region30: #{tpu_custom_call.1} parent=1 // pred_check
      _
    $region31: #{tpu_custom_call.1} parent=1 // pred_check_branch
      %58 = sbr.rel (0) target = $region33
    $region32: #{tpu_custom_call.1} parent=1 // pred_region
      %59 = dma.done [#allocation6], 2048
    $region33: #{tpu_custom_call.1} parent=1 // pred_fallthru
      _
    %v60 = vld [vmem:[#allocation2] sm:$0xff]
    %v61 = vld [vmem:[#allocation5] sm:$0xff]
    %v62 = vld [vmem:[#allocation5 + $0x8] sm:$0xff]
    %v63 = vld [vmem:[#allocation5 + $0x10] sm:$0xff]
    %v64 = vld [vmem:[#allocation5 + $0x18] sm:$0xff]
    %v65 = vld [vmem:[#allocation5 + $0x20] sm:$0xff]
    %v66 = vld [vmem:[#allocation5 + $0x28] sm:$0xff]
    %v67 = vld [vmem:[#allocation5 + $0x30] sm:$0xff]
    %v68 = vld [vmem:[#allocation5 + $0x38] sm:$0xff]
    %v69 = vld [vmem:[#allocation5 + $0x40] sm:$0xff]
    %v70 = vld [vmem:[#allocation5 + $0x48] sm:$0xff]
    %v71 = vld [vmem:[#allocation5 + $0x50] sm:$0xff]
    %v72 = vld [vmem:[#allocation5 + $0x58] sm:$0xff]
    %v73 = vld [vmem:[#allocation5 + $0x60] sm:$0xff]
    %v74 = vld [vmem:[#allocation5 + $0x68] sm:$0xff]
    %v75 = vld [vmem:[#allocation5 + $0x70] sm:$0xff]
    %v76 = vld [vmem:[#allocation5 + $0x78] sm:$0xff]
    %v77 = vld [vmem:[%s2] sm:$0x1]
    %v79 = vlaneseq
    %v80 = vshrl.u32 %v79, 7
    %v81 = vsub.s32 0, %v80
    %v82 = vrot.slane %v77, %v81
    %84 = vmatprep.subr.mxu0 0.0
    %85 = vmatpush1.msra.mxu0 %v61
    %86 = vmatprep.subr.mxu0 0.0
    %87 = vmatpush1.msra.mxu0 %v62
    %88 = vmatprep.subr.mxu0 0.0
    %89 = vmatpush1.msra.mxu0 %v63
    %90 = vmatprep.subr.mxu0 0.0
    %91 = vmatpush1.msra.mxu0 %v64
    %92 = vmatprep.subr.mxu0 0.0
    %93 = vmatpush1.msra.mxu0 %v65
    %94 = vmatprep.subr.mxu0 0.0
    %95 = vmatpush1.msra.mxu0 %v66
    %96 = vmatprep.subr.mxu0 0.0
    %97 = vmatpush1.msra.mxu0 %v67
    %98 = vmatprep.subr.mxu0 0.0
    %99 = vmatpush1.msra.mxu0 %v68
    %100 = vmatprep.subr.mxu0 0.0
    %101 = vmatpush1.msra.mxu0 %v69
    %102 = vmatprep.subr.mxu0 0.0
    %103 = vmatpush1.msra.mxu0 %v70
    %104 = vmatprep.subr.mxu0 0.0
    %105 = vmatpush1.msra.mxu0 %v71
    %106 = vmatprep.subr.mxu0 0.0
    %107 = vmatpush1.msra.mxu0 %v72
    %108 = vmatprep.subr.mxu0 0.0
    %109 = vmatpush1.msra.mxu0 %v73
    %110 = vmatprep.subr.mxu0 0.0
    %111 = vmatpush1.msra.mxu0 %v74
    %112 = vmatprep.subr.mxu0 0.0
    %113 = vmatpush1.msra.mxu0 %v75
    %114 = vmatprep.subr.mxu0 0.0
    %115 = vmatpush1.msra.mxu0 %v76
    %116 = vmatprep.subr.mxu0 0.0
    %117 = vmatpush1.msra.mxu0 0.0
    %118 = vmatprep.subr.mxu0 0.0
    %119 = vmatpush1.msra.mxu0 0.0
    %120 = vmatprep.subr.mxu0 0.0
    %121 = vmatpush1.msra.mxu0 0.0
    %122 = vmatprep.subr.mxu0 0.0
    %123 = vmatpush1.msra.mxu0 0.0
    %124 = vmatprep.subr.mxu0 0.0
    %125 = vmatpush1.msra.mxu0 0.0
    %126 = vmatprep.subr.mxu0 0.0
    %127 = vmatpush1.msra.mxu0 0.0
    %128 = vmatprep.subr.mxu0 0.0
    %129 = vmatpush1.msra.mxu0 0.0
    %130 = vmatprep.subr.mxu0 0.0
    %131 = vmatpush1.msra.mxu0 0.0
    %132 = vmatprep.subr.mxu0 0.0
    %133 = vmatpush1.msra.mxu0 0.0
    %134 = vmatprep.subr.mxu0 0.0
    %135 = vmatpush1.msra.mxu0 0.0
    %136 = vmatprep.subr.mxu0 0.0
    %137 = vmatpush1.msra.mxu0 0.0
    %138 = vmatprep.subr.mxu0 0.0
    %139 = vmatpush1.msra.mxu0 0.0
    %140 = vmatprep.subr.mxu0 0.0
    %141 = vmatpush1.msra.mxu0 0.0
    %142 = vmatprep.subr.mxu0 0.0
    %143 = vmatpush1.msra.mxu0 0.0
    %144 = vmatprep.subr.mxu0 0.0
    %145 = vmatpush1.msra.mxu0 0.0
    %146 = vmatprep.subr.mxu0 0.0
    %147 = vmatpush1.msra.mxu0 0.0
    %148 = vmatprep.mubr.f32.mxu0 0.0
    %149 = vmatmul.mubr.f32.gmra.mrb[0].mxu0 %v60
    %v150 = vpop.f32.mrb[0].mxu0
    %v151 = vadd.f32 %v82, %v150
    %v152 = vpop.f32.mrb[0].mxu0
    %153 = vdwg.mxu0
    %v154 = vtanh.pop %v151
    %v155 = vld [vmem:[#allocation7] sm:$0xff]
    %v156 = vld [vmem:[#allocation7 + $0x8] sm:$0xff]
    %v157 = vld [vmem:[#allocation7 + $0x10] sm:$0xff]
    %v158 = vld [vmem:[#allocation7 + $0x18] sm:$0xff]
    %v159 = vld [vmem:[#allocation7 + $0x20] sm:$0xff]
    %v160 = vld [vmem:[#allocation7 + $0x28] sm:$0xff]
    %v161 = vld [vmem:[#allocation7 + $0x30] sm:$0xff]
    %v162 = vld [vmem:[#allocation7 + $0x38] sm:$0xff]
    %v163 = vld [vmem:[#allocation7 + $0x40] sm:$0xff]
    %v164 = vld [vmem:[#allocation7 + $0x48] sm:$0xff]
    %v165 = vld [vmem:[#allocation7 + $0x50] sm:$0xff]
    %v166 = vld [vmem:[#allocation7 + $0x58] sm:$0xff]
    %v167 = vld [vmem:[#allocation7 + $0x60] sm:$0xff]
    %v168 = vld [vmem:[#allocation7 + $0x68] sm:$0xff]
    %v169 = vld [vmem:[#allocation7 + $0x70] sm:$0xff]
    %v170 = vld [vmem:[#allocation7 + $0x78] sm:$0xff]
    %v171 = vld [vmem:[%s4] sm:$0x1]
    %v173 = vlaneseq
    %v174 = vshrl.u32 %v173, 7
    %v175 = vsub.s32 0, %v174
    %v176 = vrot.slane %v171, %v175
    %178 = vmatprep.subr.mxu0 0.0
    %179 = vmatpush1.msra.mxu0 %v155
    %180 = vmatprep.subr.mxu0 0.0
    %181 = vmatpush1.msra.mxu0 %v156
    %182 = vmatprep.subr.mxu0 0.0
    %183 = vmatpush1.msra.mxu0 %v157
    %184 = vmatprep.subr.mxu0 0.0
    %185 = vmatpush1.msra.mxu0 %v158
    %186 = vmatprep.subr.mxu0 0.0
    %187 = vmatpush1.msra.mxu0 %v159
    %188 = vmatprep.subr.mxu0 0.0
    %189 = vmatpush1.msra.mxu0 %v160
    %190 = vmatprep.subr.mxu0 0.0
    %191 = vmatpush1.msra.mxu0 %v161
    %192 = vmatprep.subr.mxu0 0.0
    %193 = vmatpush1.msra.mxu0 %v162
    %194 = vmatprep.subr.mxu0 0.0
    %195 = vmatpush1.msra.mxu0 %v163
    %196 = vmatprep.subr.mxu0 0.0
    %197 = vmatpush1.msra.mxu0 %v164
    %198 = vmatprep.subr.mxu0 0.0
    %199 = vmatpush1.msra.mxu0 %v165
    %200 = vmatprep.subr.mxu0 0.0
    %201 = vmatpush1.msra.mxu0 %v166
    %202 = vmatprep.subr.mxu0 0.0
    %203 = vmatpush1.msra.mxu0 %v167
    %204 = vmatprep.subr.mxu0 0.0
    %205 = vmatpush1.msra.mxu0 %v168
    %206 = vmatprep.subr.mxu0 0.0
    %207 = vmatpush1.msra.mxu0 %v169
    %208 = vmatprep.subr.mxu0 0.0
    %209 = vmatpush1.msra.mxu0 %v170
    %210 = vmatprep.subr.mxu0 0.0
    %211 = vmatpush1.msra.mxu0 0.0
    %212 = vmatprep.subr.mxu0 0.0
    %213 = vmatpush1.msra.mxu0 0.0
    %214 = vmatprep.subr.mxu0 0.0
    %215 = vmatpush1.msra.mxu0 0.0
    %216 = vmatprep.subr.mxu0 0.0
    %217 = vmatpush1.msra.mxu0 0.0
    %218 = vmatprep.subr.mxu0 0.0
    %219 = vmatpush1.msra.mxu0 0.0
    %220 = vmatprep.subr.mxu0 0.0
    %221 = vmatpush1.msra.mxu0 0.0
    %222 = vmatprep.subr.mxu0 0.0
    %223 = vmatpush1.msra.mxu0 0.0
    %224 = vmatprep.subr.mxu0 0.0
    %225 = vmatpush1.msra.mxu0 0.0
    %226 = vmatprep.subr.mxu0 0.0
    %227 = vmatpush1.msra.mxu0 0.0
    %228 = vmatprep.subr.mxu0 0.0
    %229 = vmatpush1.msra.mxu0 0.0
    %230 = vmatprep.subr.mxu0 0.0
    %231 = vmatpush1.msra.mxu0 0.0
    %232 = vmatprep.subr.mxu0 0.0
    %233 = vmatpush1.msra.mxu0 0.0
    %234 = vmatprep.subr.mxu0 0.0
    %235 = vmatpush1.msra.mxu0 0.0
    %236 = vmatprep.subr.mxu0 0.0
    %237 = vmatpush1.msra.mxu0 0.0
    %238 = vmatprep.subr.mxu0 0.0
    %239 = vmatpush1.msra.mxu0 0.0
    %240 = vmatprep.subr.mxu0 0.0
    %241 = vmatpush1.msra.mxu0 0.0
    %242 = vmatprep.mubr.f32.mxu0 0.0
    %243 = vmatmul.mubr.f32.gmra.mrb[0].mxu0 %v154
    %v244 = vpop.f32.mrb[0].mxu0
    %v245 = vadd.f32 %v176, %v244
    %v246 = vpop.f32.mrb[0].mxu0
    %247 = vdwg.mxu0
    %248 = vst [vmem:[#allocation8] sm:$0xff] %v245
    // Predicated region
    $region34: #{tpu_custom_call.1} parent=1 // pred_check
      _
    $region35: #{tpu_custom_call.1} parent=1 // pred_check_branch
      %250 = sbr.rel (0) target = $region37
    $region36: #{tpu_custom_call.1} parent=1 // pred_region
      %s252 = ssub.s32 128, 128
      %253 = vsyncadd [#allocation4], %s252
      %s255 = sshll.u32 [#allocation8], 4
      %s256 = int_to_ptr.vmem [resolvable:$true] %s255
      %258 = dma.vmem_to_hbm [thread:$0]  %s256, 128, %s5, [#allocation4]
    $region37: #{tpu_custom_call.1} parent=1 // pred_fallthru
      _
    // Predicated region
    $region38: #{tpu_custom_call.1} parent=1 // pred_check
      _
    $region39: #{tpu_custom_call.1} parent=1 // pred_check_branch
      %260 = sbr.rel (0) target = $region41
    $region40: #{tpu_custom_call.1} parent=1 // pred_region
      %261 = dma.done [#allocation4], 128
    $region41: #{tpu_custom_call.1} parent=1 // pred_fallthru
      _
    %262 = vsyncpa [#allocation3], 1
    %263 = vsyncpa [#allocation6], 1
    %264 = vsyncpa [#allocation4], 1

</llo_original>
